<compile_context>
chip_gen: v7x
topology: tpu7x:2x2x1
jax: 0.10.0
libtpu: 0.0.40
codegen_flags: <defaults>
</compile_context>

<pallas_src>
import jax
import jax.numpy as jnp
from jax.experimental import pallas as pl
from jax.experimental.pallas import tpu as pltpu


def _round_up(x, m):
    return (x + m - 1) // m * m


def _cdiv(a, b):
    return (a + b - 1) // b


def critic_kernel(x_ref, w1_ref, b1_ref, w2_ref, b2_ref, w3_ref, b3_ref, o_ref):
    # Transposed formulation: batch rides the lane axis everywhere, so loads,
    # intermediates and the final (1, TM) q-row are all lane-dense.
    # ---- linear1 + relu:  (H, in1) @ (in1, TM) -> (H, TM) ----
    h1 = jnp.dot(w1_ref[...], x_ref[...], preferred_element_type=jnp.float32)
    h1 = jnp.maximum(h1 + b1_ref[...], 0.0)
    # dropout(p=0.5): identity in eval mode.

    # ---- linear2 + relu:  (H, H) @ (H, TM) -> (H, TM) ----
    h2 = jnp.dot(w2_ref[...], h1, preferred_element_type=jnp.float32)
    h2 = jnp.maximum(h2 + b2_ref[...], 0.0)
    # dropout(p=0.5): identity in eval mode.

    # ---- linear3 (H -> 1): VPU multiply + sublane (XLU) reduction.
    #      Result is already a lane-dense (1, TM) row -> single dense store. ----
    q = jnp.sum(h2 * w3_ref[...], axis=0, keepdims=True)          # (1, TM)
    o_ref[...] = q + b3_ref[0, 0]                                  # b3 scalar from SMEM


def _choose_tiling(B, max_tile, min_tiles):
    """Pick (TM, n_tiles). Single big tile by default; 128-granule when split."""
    b8 = _round_up(B, 8)
    if min_tiles <= 1 and b8 <= max_tile:
        return b8, 1                       # one tile, rounded to the f32 sublane granule
    tm_target = _cdiv(b8, max(min_tiles, 1))
    tm = min(max_tile, max(128, _round_up(tm_target, 128)))  # multi-tile => multiple of 128
    return tm, _cdiv(b8, tm)


def critic_forward(state, action, params, *, max_tile=1024, min_tiles=1):
    """state: (B, input_dim), action: (B, output_dim) -> (B, 1) float32.

    min_tiles=2 is useful on v7x (2 TensorCores) for large B; on v5e/v6e the
    default single-tile plan minimizes per-grid-step overhead.
    """
    w1, b1, w2, b2, w3_col, b3 = params
    B = state.shape[0]
    H, in1 = w1.shape

    # Fuse the two input streams once in XLA and transpose so the batch lives
    # on the lane axis: one input DMA per tile, lane-dense output.
    x_t = jnp.concatenate([state, action], axis=1).T               # (in1, B)

    TM, n_tiles = _choose_tiling(B, max_tile, min_tiles)
    B_pad = TM * n_tiles
    if B_pad != B:
        x_t = jnp.pad(x_t, ((0, 0), (0, B_pad - B)))

    pinned = lambda i: (0, 0)              # VMEM-resident weights/biases

    out = pl.pallas_call(
        critic_kernel,
        out_shape=jax.ShapeDtypeStruct((1, B_pad), jnp.float32),
        grid=(n_tiles,),
        in_specs=[
            pl.BlockSpec((in1, TM), lambda i: (0, i)),   # x^T batch columns (pipelined DMA)
            pl.BlockSpec((H, in1), pinned),              # W1 (PyTorch (out,in) layout)
            pl.BlockSpec((H, 1), pinned),                # b1 column
            pl.BlockSpec((H, H), pinned),                # W2
            pl.BlockSpec((H, 1), pinned),                # b2 column
            pl.BlockSpec((H, 1), pinned),                # W3 column
            pl.BlockSpec(memory_space=pltpu.MemorySpace.SMEM),   # b3 scalar
        ],
        out_specs=pl.BlockSpec((1, TM), lambda i: (0, i)),        # lane-dense q row
        compiler_params=pltpu.CompilerParams(
            dimension_semantics=("parallel",),   # v7x: batch tiles split across the 2 TCs
        ),
    )(x_t, w1, b1, w2, b2, w3_col, b3)

    return out[0, :B].reshape(B, 1)


def init_params(key, input_dim, output_dim, hidden_dim):
    """Deterministic synthetic parameters, stored in kernel-ready layouts.

    w1/w2 use the native PyTorch Linear (out_features, in_features) layout,
    biases are (H, 1) columns, w3 is pre-reshaped to an (H, 1) column and b3 is
    a (1, 1) scalar -- so the forward wrapper never slices/reshapes per call.
    """
    k1, k2, k3, k4, k5, k6 = jax.random.split(key, 6)
    in1 = input_dim + output_dim
    w1 = jax.random.normal(k1, (hidden_dim, in1), jnp.float32) * 0.1
    b1 = jax.random.normal(k2, (hidden_dim, 1), jnp.float32) * 0.1
    w2 = jax.random.normal(k3, (hidden_dim, hidden_dim), jnp.float32) * 0.1
    b2 = jax.random.normal(k4, (hidden_dim, 1), jnp.float32) * 0.1
    w3 = jax.random.normal(k5, (hidden_dim, 1), jnp.float32) * 0.1
    b3 = jax.random.normal(k6, (1, 1), jnp.float32) * 0.1
    return (w1, b1, w2, b2, w3, b3)


def critic_ref(state, action, params):
    """Pure-JAX reference mirroring the PyTorch module (eval mode)."""
    w1, b1, w2, b2, w3, b3 = params
    x = jnp.concatenate([state, action], axis=1)
    x = jnp.maximum(x @ w1.T + b1.T, 0.0)
    x = jnp.maximum(x @ w2.T + b2.T, 0.0)
    return x @ w3 + b3


if __name__ == "__main__":
    # Small shapes consistent with the module: state dim 16, action dim 8, hidden 32.
    B, INPUT_DIM, OUTPUT_DIM, HIDDEN_DIM = 2, 16, 8, 32

    key = jax.random.PRNGKey(0)
    ks, ka, kp, ks2, ka2, ks3, ka3 = jax.random.split(key, 7)

    params = init_params(kp, INPUT_DIM, OUTPUT_DIM, HIDDEN_DIM)

    # Tiny batch (single 8-row tile, grid=(1,)).
    state = jax.random.normal(ks, (B, INPUT_DIM), jnp.float32)
    action = jax.random.normal(ka, (B, OUTPUT_DIM), jnp.float32)
    out = jax.block_until_ready(critic_forward(state, action, params))
    ref = critic_ref(state, action, params)
    assert out.shape == (B, 1), out.shape
    assert jnp.allclose(out, ref, atol=1e-5, rtol=1e-5), (out, ref)

    # Medium batch: still a single (304-wide) tile -> minimal per-step overhead.
    B2 = 300
    state2 = jax.random.normal(ks2, (B2, INPUT_DIM), jnp.float32)
    action2 = jax.random.normal(ka2, (B2, OUTPUT_DIM), jnp.float32)
    out2 = jax.block_until_ready(critic_forward(state2, action2, params))
    ref2 = critic_ref(state2, action2, params)
    assert out2.shape == (B2, 1), out2.shape
    assert jnp.allclose(out2, ref2, atol=1e-5, rtol=1e-5)

    # Large batch exercising the multi-tile grid (TM=1024, 3 tiles + padding),
    # the regime where the "parallel" batch axis matters on v7x.
    B3 = 2500
    state3 = jax.random.normal(ks3, (B3, INPUT_DIM), jnp.float32)
    action3 = jax.random.normal(ka3, (B3, OUTPUT_DIM), jnp.float32)
    out3 = jax.block_until_ready(critic_forward(state3, action3, params))
    ref3 = critic_ref(state3, action3, params)
    assert out3.shape == (B3, 1), out3.shape
    assert jnp.allclose(out3, ref3, atol=1e-5, rtol=1e-5)

    print("KERNEL_OK")
</pallas_src>

<mosaic_0001>
module attributes {stable_mosaic.version = 11 : i64} {
  func.func @critic_kernel(%arg0: i32, %arg1: memref<24x8xf32, #tpu.memory_space<vmem>>, %arg2: memref<32x24xf32, #tpu.memory_space<vmem>>, %arg3: memref<32x1xf32, #tpu.memory_space<vmem>>, %arg4: memref<32x32xf32, #tpu.memory_space<vmem>>, %arg5: memref<32x1xf32, #tpu.memory_space<vmem>>, %arg6: memref<32x1xf32, #tpu.memory_space<vmem>>, %arg7: memref<1x1xf32, #tpu.memory_space<smem>>, %arg8: memref<1x8xf32, #tpu.memory_space<vmem>>) attributes {dimension_semantics = [#tpu.dimension_semantics<parallel>], iteration_bounds = array<i64: 1>, scalar_prefetch = 0 : i64, scratch_operands = 0 : i64, tpu.core_type = #tpu.core_type<tc>, window_params = [{transform_indices = @transform_0, window_bounds = array<i64: 24, 8>}, {pipeline_mode = #tpu.pipeline_mode<synchronous>, transform_indices = @transform_1, window_bounds = array<i64: 32, 24>}, {pipeline_mode = #tpu.pipeline_mode<synchronous>, transform_indices = @transform_2, window_bounds = array<i64: 32, 1>}, {pipeline_mode = #tpu.pipeline_mode<synchronous>, transform_indices = @transform_3, window_bounds = array<i64: 32, 32>}, {pipeline_mode = #tpu.pipeline_mode<synchronous>, transform_indices = @transform_4, window_bounds = array<i64: 32, 1>}, {pipeline_mode = #tpu.pipeline_mode<synchronous>, transform_indices = @transform_5, window_bounds = array<i64: 32, 1>}, {transform_indices = @transform_6, window_bounds = array<i64: 1, 1>}, {transform_indices = @transform_7, window_bounds = array<i64: 1, 8>}]} {
    %c0 = arith.constant 0 : index
    %c0_0 = arith.constant 0 : index
    %0 = vector.load %arg2[%c0, %c0_0] : memref<32x24xf32, #tpu.memory_space<vmem>>, vector<32x24xf32>
    %c0_1 = arith.constant 0 : index
    %c0_2 = arith.constant 0 : index
    %1 = vector.load %arg1[%c0_1, %c0_2] : memref<24x8xf32, #tpu.memory_space<vmem>>, vector<24x8xf32>
    %cst = arith.constant dense<0.000000e+00> : vector<32x8xf32>
    %2 = tpu.matmul %0, %1, %cst {dimension_numbers = #tpu.dot_dimension_numbers<[1], [0], [0], [1], [0, 0, 1, 1], [], []>} : vector<32x24xf32>, vector<24x8xf32>, vector<32x8xf32> -> vector<32x8xf32>
    %c0_3 = arith.constant 0 : index
    %c0_4 = arith.constant 0 : index
    %3 = vector.load %arg3[%c0_3, %c0_4] : memref<32x1xf32, #tpu.memory_space<vmem>>, vector<32x1xf32>
    %4 = vector.broadcast %3 : vector<32x1xf32> to vector<32x8xf32>
    %5 = arith.addf %2, %4 : vector<32x8xf32>
    %cst_5 = arith.constant 0.000000e+00 : f32
    %6 = vector.broadcast %cst_5 : f32 to vector<32x8xf32>
    %7 = arith.maximumf %5, %6 : vector<32x8xf32>
    %c0_6 = arith.constant 0 : index
    %c0_7 = arith.constant 0 : index
    %8 = vector.load %arg4[%c0_6, %c0_7] : memref<32x32xf32, #tpu.memory_space<vmem>>, vector<32x32xf32>
    %cst_8 = arith.constant dense<0.000000e+00> : vector<32x8xf32>
    %9 = tpu.matmul %8, %7, %cst_8 {dimension_numbers = #tpu.dot_dimension_numbers<[1], [0], [0], [1], [0, 0, 1, 1], [], []>} : vector<32x32xf32>, vector<32x8xf32>, vector<32x8xf32> -> vector<32x8xf32>
    %c0_9 = arith.constant 0 : index
    %c0_10 = arith.constant 0 : index
    %10 = vector.load %arg5[%c0_9, %c0_10] : memref<32x1xf32, #tpu.memory_space<vmem>>, vector<32x1xf32>
    %11 = vector.broadcast %10 : vector<32x1xf32> to vector<32x8xf32>
    %12 = arith.addf %9, %11 : vector<32x8xf32>
    %cst_11 = arith.constant 0.000000e+00 : f32
    %13 = vector.broadcast %cst_11 : f32 to vector<32x8xf32>
    %14 = arith.maximumf %12, %13 : vector<32x8xf32>
    %c0_12 = arith.constant 0 : index
    %c0_13 = arith.constant 0 : index
    %15 = vector.load %arg6[%c0_12, %c0_13] : memref<32x1xf32, #tpu.memory_space<vmem>>, vector<32x1xf32>
    %16 = vector.broadcast %15 : vector<32x1xf32> to vector<32x8xf32>
    %17 = arith.mulf %14, %16 : vector<32x8xf32>
    %cst_14 = arith.constant dense<0.000000e+00> : vector<8xf32>
    %18 = vector.multi_reduction <add>, %17, %cst_14 [0] : vector<32x8xf32> to vector<8xf32>
    %19 = vector.shape_cast %18 : vector<8xf32> to vector<1x8xf32>
    %c0_15 = arith.constant 0 : index
    %c0_16 = arith.constant 0 : index
    %20 = memref.load %arg7[%c0_15, %c0_16] : memref<1x1xf32, #tpu.memory_space<smem>>
    %21 = vector.broadcast %20 : f32 to vector<1x8xf32>
    %22 = arith.addf %19, %21 : vector<1x8xf32>
    %c0_17 = arith.constant 0 : index
    %c0_18 = arith.constant 0 : index
    %23 = vector.load %arg8[%c0_17, %c0_18] : memref<1x8xf32, #tpu.memory_space<vmem>>, vector<1x8xf32>
    tpu.vector_store %arg8[%c0_17, %c0_18], %22 {strides = array<i32>} : memref<1x8xf32, #tpu.memory_space<vmem>>, vector<1x8xf32>,
    return
  }
  func.func @transform_0(%arg0: i32) -> (i32, i32) {
    %c0_i32 = arith.constant 0 : i32
    %c0_i32_0 = arith.constant 0 : i32
    return %c0_i32, %arg0 : i32, i32
  }
  func.func @transform_1(%arg0: i32) -> (i32, i32) {
    %c0_i32 = arith.constant 0 : i32
    %c0_i32_0 = arith.constant 0 : i32
    %c0_i32_1 = arith.constant 0 : i32
    return %c0_i32, %c0_i32_0 : i32, i32
  }
  func.func @transform_2(%arg0: i32) -> (i32, i32) {
    %c0_i32 = arith.constant 0 : i32
    %c0_i32_0 = arith.constant 0 : i32
    %c0_i32_1 = arith.constant 0 : i32
    return %c0_i32, %c0_i32_0 : i32, i32
  }
  func.func @transform_3(%arg0: i32) -> (i32, i32) {
    %c0_i32 = arith.constant 0 : i32
    %c0_i32_0 = arith.constant 0 : i32
    %c0_i32_1 = arith.constant 0 : i32
    return %c0_i32, %c0_i32_0 : i32, i32
  }
  func.func @transform_4(%arg0: i32) -> (i32, i32) {
    %c0_i32 = arith.constant 0 : i32
    %c0_i32_0 = arith.constant 0 : i32
    %c0_i32_1 = arith.constant 0 : i32
    return %c0_i32, %c0_i32_0 : i32, i32
  }
  func.func @transform_5(%arg0: i32) -> (i32, i32) {
    %c0_i32 = arith.constant 0 : i32
    %c0_i32_0 = arith.constant 0 : i32
    %c0_i32_1 = arith.constant 0 : i32
    return %c0_i32, %c0_i32_0 : i32, i32
  }
  func.func @transform_6(%arg0: i32) -> (i32, i32) {
    %c0_i32 = arith.constant 0 : i32
    %c0_i32_0 = arith.constant 0 : i32
    %c0_i32_1 = arith.constant 0 : i32
    return %c0_i32, %c0_i32_0 : i32, i32
  }
  func.func @transform_7(%arg0: i32) -> (i32, i32) {
    %c0_i32 = arith.constant 0 : i32
    %c0_i32_0 = arith.constant 0 : i32
    return %c0_i32, %arg0 : i32, i32
  }
}

</mosaic_0001>

<llo_original>
// kernel: tpu_custom_call.1
$region0: #{tpu_custom_call.1}
  #allocation0 [shape = 'u32[]', space=smem, size = 0x4, offset = 0x4, fixed_abs, tag = 'smem constant byte address 0x4 - core index']
  #allocation1 [shape = 'u32[144,128]{1,0:T(1,128)}', space=vmem, size = 0x12000, scoped, tag = 'internal scratch']
  #allocation2 [shape = 'f32[1,1]{1,0:T(1,128)S(6)}', space=smem, size = 0x200, scoped, tag = 'scoped memory for tpu_custom_call.1']
  %s0 = inlined_call_operand.vmem [shape: f32[24,8], index: 0, kind: input, shape index: {}]
  %s1 = inlined_call_operand.vmem [shape: f32[32,24], index: 1, kind: input, shape index: {}]
  %s2 = inlined_call_operand.vmem [shape: f32[32,1], index: 2, kind: input, shape index: {}]
  %s3 = inlined_call_operand.vmem [shape: f32[32,32], index: 3, kind: input, shape index: {}]
  %s4 = inlined_call_operand.vmem [shape: f32[32,1], index: 4, kind: input, shape index: {}]
  %s5 = inlined_call_operand.vmem [shape: f32[32,1], index: 5, kind: input, shape index: {}]
  %s6 = inlined_call_operand.<no memory space> [shape: f32[1,1], index: 6, kind: input, shape index: {}]
  %s7 = inlined_call_operand.hbm [shape: f32[1,8], index: 7, kind: output, shape index: {}]
  %s8 = sld [smem:[#allocation0]]
  $region38: #{tpu_custom_call.1} parent=0
    _
  %s10 = ssub.s32 1, %s8
  %s11 = scalar_select 0, %s10, %s8
  %12 = sst [smem:[#allocation2]] %s6
  $region1: #{tpu_custom_call.1} parent=0
    #allocation3 [shape = 'u8[512]{0}', space=vmem, size = 0x400, scoped, tag = 'output window, operand 0, single buffered']
    #allocation4 [shape = 's32[1]{0}', space=sflag, size = 0x4, scoped, tag = 'scoped memory for tpu_custom_call.1']
    %13 = vsyncpa [#allocation4], 0
    // Predicated region
    $region2: #{tpu_custom_call.1} parent=1 // pred_check
      _
    $region3: #{tpu_custom_call.1} parent=1 // pred_check_branch
      %15 = sbr.rel (0) target = $region5
    $region4: #{tpu_custom_call.1} parent=1 // pred_region
      _
    $region5: #{tpu_custom_call.1} parent=1 // pred_fallthru
      _
    // Predicated region
    $region6: #{tpu_custom_call.1} parent=1 // pred_check
      _
    $region7: #{tpu_custom_call.1} parent=1 // pred_check_branch
      %17 = sbr.rel (0) target = $region9
    $region8: #{tpu_custom_call.1} parent=1 // pred_region
      _
    $region9: #{tpu_custom_call.1} parent=1 // pred_fallthru
      _
    // Predicated region
    $region10: #{tpu_custom_call.1} parent=1 // pred_check
      _
    $region11: #{tpu_custom_call.1} parent=1 // pred_check_branch
      %19 = sbr.rel (0) target = $region13
    $region12: #{tpu_custom_call.1} parent=1 // pred_region
      _
    $region13: #{tpu_custom_call.1} parent=1 // pred_fallthru
      _
    // Predicated region
    $region14: #{tpu_custom_call.1} parent=1 // pred_check
      _
    $region15: #{tpu_custom_call.1} parent=1 // pred_check_branch
      %21 = sbr.rel (0) target = $region17
    $region16: #{tpu_custom_call.1} parent=1 // pred_region
      _
    $region17: #{tpu_custom_call.1} parent=1 // pred_fallthru
      _
    // Predicated region
    $region18: #{tpu_custom_call.1} parent=1 // pred_check
      _
    $region19: #{tpu_custom_call.1} parent=1 // pred_check_branch
      %23 = sbr.rel (0) target = $region21
    $region20: #{tpu_custom_call.1} parent=1 // pred_region
      _
    $region21: #{tpu_custom_call.1} parent=1 // pred_fallthru
      _
    // Predicated region
    $region22: #{tpu_custom_call.1} parent=1 // pred_check
      _
    $region23: #{tpu_custom_call.1} parent=1 // pred_check_branch
      %25 = sbr.rel (0) target = $region25
    $region24: #{tpu_custom_call.1} parent=1 // pred_region
      _
    $region25: #{tpu_custom_call.1} parent=1 // pred_fallthru
      _
    // Predicated region
    $region26: #{tpu_custom_call.1} parent=1 // pred_check
      _
    $region27: #{tpu_custom_call.1} parent=1 // pred_check_branch
      %27 = sbr.rel (0) target = $region29
    $region28: #{tpu_custom_call.1} parent=1 // pred_region
      _
    $region29: #{tpu_custom_call.1} parent=1 // pred_fallthru
      _
    %v28 = vld [vmem:[%s1] sm:$0xff]
    %v29 = vld [vmem:[%s1 + $0x8] sm:$0xff]
    %v30 = vld [vmem:[%s1 + $0x10] sm:$0xff]
    %v31 = vld [vmem:[%s1 + $0x18] sm:$0xff]
    %v32 = vld [vmem:[%s0] sm:$0xff]
    %v33 = vld [vmem:[%s0 + $0x8] sm:$0xff]
    %v34 = vld [vmem:[%s0 + $0x10] sm:$0xff]
    %v35 = vld [vmem:[%s2] sm:$0xff]
    %v36 = vld [vmem:[%s2 + $0x8] sm:$0xff]
    %v37 = vld [vmem:[%s2 + $0x10] sm:$0xff]
    %v38 = vld [vmem:[%s2 + $0x18] sm:$0xff]
    %40 = vset.pattern.permute.xlu0 0
    %41 = vperm.xlu0 %40, %v35
    %v42 = vpop.permute.xlu0 %41
    %45 = vset.pattern.permute.xlu0 0
    %46 = vperm.xlu0 %45, %v36
    %v47 = vpop.permute.xlu0 %46
    %50 = vset.pattern.permute.xlu0 0
    %51 = vperm.xlu0 %50, %v37
    %v52 = vpop.permute.xlu0 %51
    %55 = vset.pattern.permute.xlu0 0
    %56 = vperm.xlu0 %55, %v38
    %v57 = vpop.permute.xlu0 %56
    %vm59 = vcmask 195584
    %v61 = vsel %vm59, %v28, 0
    %v64 = vsel %vm59, %v29, 0
    %v67 = vsel %vm59, %v30, 0
    %v70 = vsel %vm59, %v31, 0
    %72 = vmatprep.subr.mxu0 0.0
    %73 = vmatpush1.msra.mxu0 %v32
    %74 = vmatprep.subr.mxu0 0.0
    %75 = vmatpush1.msra.mxu0 %v33
    %76 = vmatprep.subr.mxu0 0.0
    %77 = vmatpush1.msra.mxu0 %v34
    %78 = vmatprep.subr.mxu0 0.0
    %79 = vmatpush1.msra.mxu0 0.0
    %80 = vmatprep.subr.mxu0 0.0
    %81 = vmatpush1.msra.mxu0 0.0
    %82 = vmatprep.subr.mxu0 0.0
    %83 = vmatpush1.msra.mxu0 0.0
    %84 = vmatprep.subr.mxu0 0.0
    %85 = vmatpush1.msra.mxu0 0.0
    %86 = vmatprep.subr.mxu0 0.0
    %87 = vmatpush1.msra.mxu0 0.0
    %88 = vmatprep.subr.mxu0 0.0
    %89 = vmatpush1.msra.mxu0 0.0
    %90 = vmatprep.subr.mxu0 0.0
    %91 = vmatpush1.msra.mxu0 0.0
    %92 = vmatprep.subr.mxu0 0.0
    %93 = vmatpush1.msra.mxu0 0.0
    %94 = vmatprep.subr.mxu0 0.0
    %95 = vmatpush1.msra.mxu0 0.0
    %96 = vmatprep.subr.mxu0 0.0
    %97 = vmatpush1.msra.mxu0 0.0
    %98 = vmatprep.subr.mxu0 0.0
    %99 = vmatpush1.msra.mxu0 0.0
    %100 = vmatprep.subr.mxu0 0.0
    %101 = vmatpush1.msra.mxu0 0.0
    %102 = vmatprep.subr.mxu0 0.0
    %103 = vmatpush1.msra.mxu0 0.0
    %104 = vmatprep.subr.mxu0 0.0
    %105 = vmatpush1.msra.mxu0 0.0
    %106 = vmatprep.subr.mxu0 0.0
    %107 = vmatpush1.msra.mxu0 0.0
    %108 = vmatprep.subr.mxu0 0.0
    %109 = vmatpush1.msra.mxu0 0.0
    %110 = vmatprep.subr.mxu0 0.0
    %111 = vmatpush1.msra.mxu0 0.0
    %112 = vmatprep.subr.mxu0 0.0
    %113 = vmatpush1.msra.mxu0 0.0
    %114 = vmatprep.subr.mxu0 0.0
    %115 = vmatpush1.msra.mxu0 0.0
    %116 = vmatprep.subr.mxu0 0.0
    %117 = vmatpush1.msra.mxu0 0.0
    %118 = vmatprep.subr.mxu0 0.0
    %119 = vmatpush1.msra.mxu0 0.0
    %120 = vmatprep.subr.mxu0 0.0
    %121 = vmatpush1.msra.mxu0 0.0
    %122 = vmatprep.subr.mxu0 0.0
    %123 = vmatpush1.msra.mxu0 0.0
    %124 = vmatprep.subr.mxu0 0.0
    %125 = vmatpush1.msra.mxu0 0.0
    %126 = vmatprep.subr.mxu0 0.0
    %127 = vmatpush1.msra.mxu0 0.0
    %128 = vmatprep.subr.mxu0 0.0
    %129 = vmatpush1.msra.mxu0 0.0
    %130 = vmatprep.subr.mxu0 0.0
    %131 = vmatpush1.msra.mxu0 0.0
    %132 = vmatprep.subr.mxu0 0.0
    %133 = vmatpush1.msra.mxu0 0.0
    %134 = vmatprep.subr.mxu0 0.0
    %135 = vmatpush1.msra.mxu0 0.0
    %136 = vmatprep.mubr.f32.mxu0 0.0
    %137 = vmatmul.mubr.f32.gmra.mrb[0].mxu0 %v61
    %v138 = vpop.f32.mrb[0].mxu0
    %v139 = vadd.f32 %v42, %v138
    %v140 = vpop.f32.mrb[0].mxu0
    %141 = vmatprep.mubr.f32.mxu0 0.0
    %142 = vmatmul.mubr.f32.gmra.mrb[0].mxu0 %v64
    %v143 = vpop.f32.mrb[0].mxu0
    %v144 = vadd.f32 %v47, %v143
    %v145 = vpop.f32.mrb[0].mxu0
    %146 = vmatprep.mubr.f32.mxu0 0.0
    %147 = vmatmul.mubr.f32.gmra.mrb[0].mxu0 %v67
    %v148 = vpop.f32.mrb[0].mxu0
    %v149 = vadd.f32 %v52, %v148
    %v150 = vpop.f32.mrb[0].mxu0
    %151 = vmatprep.mubr.f32.mxu0 0.0
    %152 = vmatmul.mubr.f32.gmra.mrb[0].mxu0 %v70
    %v153 = vpop.f32.mrb[0].mxu0
    %v154 = vadd.f32 %v57, %v153
    %v155 = vpop.f32.mrb[0].mxu0
    %156 = vdwg.mxu0
    %v157 = vmax.f32 %v139, 0.0
    %v158 = vmax.f32 %v144, 0.0
    %v159 = vmax.f32 %v149, 0.0
    %v160 = vmax.f32 %v154, 0.0
    %v161 = vld [vmem:[%s3] sm:$0xff]
    %v162 = vld [vmem:[%s3 + $0x8] sm:$0xff]
    %v163 = vld [vmem:[%s3 + $0x10] sm:$0xff]
    %v164 = vld [vmem:[%s3 + $0x18] sm:$0xff]
    %v165 = vld [vmem:[%s4] sm:$0xff]
    %v166 = vld [vmem:[%s4 + $0x8] sm:$0xff]
    %v167 = vld [vmem:[%s4 + $0x10] sm:$0xff]
    %v168 = vld [vmem:[%s4 + $0x18] sm:$0xff]
    %170 = vset.pattern.permute.xlu0 0
    %171 = vperm.xlu0 %170, %v165
    %v172 = vpop.permute.xlu0 %171
    %175 = vset.pattern.permute.xlu0 0
    %176 = vperm.xlu0 %175, %v166
    %v177 = vpop.permute.xlu0 %176
    %180 = vset.pattern.permute.xlu0 0
    %181 = vperm.xlu0 %180, %v167
    %v182 = vpop.permute.xlu0 %181
    %185 = vset.pattern.permute.xlu0 0
    %186 = vperm.xlu0 %185, %v168
    %v187 = vpop.permute.xlu0 %186
    %vm189 = vcmask 261120
    %v191 = vsel %vm189, %v161, 0
    %v194 = vsel %vm189, %v162, 0
    %v197 = vsel %vm189, %v163, 0
    %v200 = vsel %vm189, %v164, 0
    %202 = vmatprep.subr.mxu0 0.0
    %203 = vmatpush1.msra.mxu0 %v157
    %204 = vmatprep.subr.mxu0 0.0
    %205 = vmatpush1.msra.mxu0 %v158
    %206 = vmatprep.subr.mxu0 0.0
    %207 = vmatpush1.msra.mxu0 %v159
    %208 = vmatprep.subr.mxu0 0.0
    %209 = vmatpush1.msra.mxu0 %v160
    %210 = vmatprep.subr.mxu0 0.0
    %211 = vmatpush1.msra.mxu0 0.0
    %212 = vmatprep.subr.mxu0 0.0
    %213 = vmatpush1.msra.mxu0 0.0
    %214 = vmatprep.subr.mxu0 0.0
    %215 = vmatpush1.msra.mxu0 0.0
    %216 = vmatprep.subr.mxu0 0.0
    %217 = vmatpush1.msra.mxu0 0.0
    %218 = vmatprep.subr.mxu0 0.0
    %219 = vmatpush1.msra.mxu0 0.0
    %220 = vmatprep.subr.mxu0 0.0
    %221 = vmatpush1.msra.mxu0 0.0
    %222 = vmatprep.subr.mxu0 0.0
    %223 = vmatpush1.msra.mxu0 0.0
    %224 = vmatprep.subr.mxu0 0.0
    %225 = vmatpush1.msra.mxu0 0.0
    %226 = vmatprep.subr.mxu0 0.0
    %227 = vmatpush1.msra.mxu0 0.0
    %228 = vmatprep.subr.mxu0 0.0
    %229 = vmatpush1.msra.mxu0 0.0
    %230 = vmatprep.subr.mxu0 0.0
    %231 = vmatpush1.msra.mxu0 0.0
    %232 = vmatprep.subr.mxu0 0.0
    %233 = vmatpush1.msra.mxu0 0.0
    %234 = vmatprep.subr.mxu0 0.0
    %235 = vmatpush1.msra.mxu0 0.0
    %236 = vmatprep.subr.mxu0 0.0
    %237 = vmatpush1.msra.mxu0 0.0
    %238 = vmatprep.subr.mxu0 0.0
    %239 = vmatpush1.msra.mxu0 0.0
    %240 = vmatprep.subr.mxu0 0.0
    %241 = vmatpush1.msra.mxu0 0.0
    %242 = vmatprep.subr.mxu0 0.0
    %243 = vmatpush1.msra.mxu0 0.0
    %244 = vmatprep.subr.mxu0 0.0
    %245 = vmatpush1.msra.mxu0 0.0
    %246 = vmatprep.subr.mxu0 0.0
    %247 = vmatpush1.msra.mxu0 0.0
    %248 = vmatprep.subr.mxu0 0.0
    %249 = vmatpush1.msra.mxu0 0.0
    %250 = vmatprep.subr.mxu0 0.0
    %251 = vmatpush1.msra.mxu0 0.0
    %252 = vmatprep.subr.mxu0 0.0
    %253 = vmatpush1.msra.mxu0 0.0
    %254 = vmatprep.subr.mxu0 0.0
    %255 = vmatpush1.msra.mxu0 0.0
    %256 = vmatprep.subr.mxu0 0.0
    %257 = vmatpush1.msra.mxu0 0.0
    %258 = vmatprep.subr.mxu0 0.0
    %259 = vmatpush1.msra.mxu0 0.0
    %260 = vmatprep.subr.mxu0 0.0
    %261 = vmatpush1.msra.mxu0 0.0
    %262 = vmatprep.subr.mxu0 0.0
    %263 = vmatpush1.msra.mxu0 0.0
    %264 = vmatprep.subr.mxu0 0.0
    %265 = vmatpush1.msra.mxu0 0.0
    %266 = vmatprep.mubr.f32.mxu0 0.0
    %267 = vmatmul.mubr.f32.gmra.mrb[0].mxu0 %v191
    %v268 = vpop.f32.mrb[0].mxu0
    %v269 = vadd.f32 %v172, %v268
    %v270 = vpop.f32.mrb[0].mxu0
    %271 = vmatprep.mubr.f32.mxu0 0.0
    %272 = vmatmul.mubr.f32.gmra.mrb[0].mxu0 %v194
    %v273 = vpop.f32.mrb[0].mxu0
    %v274 = vadd.f32 %v177, %v273
    %v275 = vpop.f32.mrb[0].mxu0
    %276 = vmatprep.mubr.f32.mxu0 0.0
    %277 = vmatmul.mubr.f32.gmra.mrb[0].mxu0 %v197
    %v278 = vpop.f32.mrb[0].mxu0
    %v279 = vadd.f32 %v182, %v278
    %v280 = vpop.f32.mrb[0].mxu0
    %281 = vmatprep.mubr.f32.mxu0 0.0
    %282 = vmatmul.mubr.f32.gmra.mrb[0].mxu0 %v200
    %v283 = vpop.f32.mrb[0].mxu0
    %v284 = vadd.f32 %v187, %v283
    %v285 = vpop.f32.mrb[0].mxu0
    %286 = vdwg.mxu0
    %v287 = vmax.f32 %v269, 0.0
    %v288 = vmax.f32 %v274, 0.0
    %v289 = vmax.f32 %v279, 0.0
    %v290 = vmax.f32 %v284, 0.0
    %v291 = vld [vmem:[%s5] sm:$0xff]
    %v292 = vld [vmem:[%s5 + $0x8] sm:$0xff]
    %v293 = vld [vmem:[%s5 + $0x10] sm:$0xff]
    %v294 = vld [vmem:[%s5 + $0x18] sm:$0xff]
    %296 = vset.pattern.permute.xlu0 0
    %297 = vperm.xlu0 %296, %v291
    %v298 = vpop.permute.xlu0 %297
    %301 = vset.pattern.permute.xlu0 0
    %302 = vperm.xlu0 %301, %v292
    %v303 = vpop.permute.xlu0 %302
    %306 = vset.pattern.permute.xlu0 0
    %307 = vperm.xlu0 %306, %v293
    %v308 = vpop.permute.xlu0 %307
    %311 = vset.pattern.permute.xlu0 0
    %312 = vperm.xlu0 %311, %v294
    %v313 = vpop.permute.xlu0 %312
    %v315 = vmul.f32 %v287, %v298
    %v316 = vmul.f32 %v288, %v303
    %v317 = vmul.f32 %v289, %v308
    %v318 = vmul.f32 %v290, %v313
    %vm319 = vcmask 64512
    %v320 = vsel %vm319, %v315, 0.0
    %v321 = vsel %vm319, %v316, 0.0
    %v322 = vadd.f32 %v320, %v321
    %v323 = vsel %vm319, %v317, 0.0
    %v324 = vadd.f32 %v322, %v323
    %v325 = vsel %vm319, %v318, 0.0
    %v326 = vadd.f32 %v324, %v325
    %v327 = vrot.slane %v326, 4
    %v328 = vadd.f32 %v326, %v327
    %v329 = vrot.slane %v328, 2
    %v330 = vadd.f32 %v328, %v329
    %v331 = vrot.slane %v330, 1
    %v332 = vadd.f32 %v330, %v331
    %s333 = sld [smem:[#allocation2]]
    %v334 = vstv %s333
    %v335 = vadd.f32 %v332, %v334
    %vm336 = vcmask 57344
    %337 = vst.msk [vmem:[#allocation3] sm:$0x1] %vm336, %v335
    // Predicated region
    $region30: #{tpu_custom_call.1} parent=1 // pred_check
      _
    $region31: #{tpu_custom_call.1} parent=1 // pred_check_branch
      %339 = sbr.rel (0) target = $region33
    $region32: #{tpu_custom_call.1} parent=1 // pred_region
      %s341 = ssub.s32 16, 16
      %342 = vsyncadd [#allocation4], %s341
      %s344 = sshll.u32 [#allocation3], 4
      %s345 = int_to_ptr.vmem [resolvable:$true] %s344
      %347 = dma.vmem_to_hbm [thread:$0]  %s345, 16, %s7, [#allocation4]
    $region33: #{tpu_custom_call.1} parent=1 // pred_fallthru
      _
    // Predicated region
    $region34: #{tpu_custom_call.1} parent=1 // pred_check
      _
    $region35: #{tpu_custom_call.1} parent=1 // pred_check_branch
      %349 = sbr.rel (0) target = $region37
    $region36: #{tpu_custom_call.1} parent=1 // pred_region
      %350 = dma.done [#allocation4], 16
    $region37: #{tpu_custom_call.1} parent=1 // pred_fallthru
      _
    %351 = vsyncpa [#allocation4], 1

</llo_original>
